<compile_context>
chip_gen: v5e
topology: v5e:2x2
jax: 0.10.0
libtpu: 0.0.40
codegen_flags: <defaults>
</compile_context>

<pallas_src>
import math
import jax
import jax.numpy as jnp
from jax.experimental import pallas as pl
from jax.experimental.pallas import tpu as pltpu


def _round_up(n, m):
    return ((n + m - 1) // m) * m


def mlp_kernel(x_ref, w1_ref, b1_ref, w2_ref, b2_ref, w3_ref, b3_ref, o_ref):
    # Layer 1: Linear + ReLU.  MXU matmul with f32 accumulation; bias/ReLU in f32.
    h1 = jnp.dot(x_ref[...], w1_ref[...], preferred_element_type=jnp.float32)
    h1 = jnp.maximum(h1 + b1_ref[...], 0.0)
    # Layer 2: Linear + ReLU.  Cast activations to the operand dtype only right
    # before the dot (bf16 MXU path when compute_dtype=bf16; no-op for f32).
    h2 = jnp.dot(h1.astype(w2_ref.dtype), w2_ref[...],
                 preferred_element_type=jnp.float32)
    h2 = jnp.maximum(h2 + b2_ref[...], 0.0)
    # Layer 3: Linear (output "actions", no activation).  Output block is (tb, OUT).
    out = jnp.dot(h2.astype(w3_ref.dtype), w3_ref[...],
                  preferred_element_type=jnp.float32) + b3_ref[...]
    o_ref[...] = out.astype(o_ref.dtype)


def simplenet_forward(x, params, *, batch_tile=None,
                      compute_dtype=jnp.bfloat16, vmem_limit_bytes=None):
    """Fused 3-layer MLP forward pass in one pallas_call.

    x: (B, INPUT_SHAPE) float32
    params: dict of w1 (IN,64), b1 (1,64), w2 (64,64), b2 (1,64), w3 (64,OUT), b3 (1,OUT)
    """
    B, IN = x.shape
    H = params["w1"].shape[1]
    OUT = params["w3"].shape[1]

    # Row alignment: 8 sublanes for f32, 16 for bf16 (packed 2 rows/sublane).
    row_align = 16 if jnp.dtype(compute_dtype) == jnp.dtype(jnp.bfloat16) else 8

    # ---- Batch tiling: aim for >=4 grid steps on large B, tile cap 4096 rows ----
    if batch_tile is None:
        tb = _round_up(max(pl.cdiv(B, 4), row_align), row_align)
        tb = min(tb, 4096)
    else:
        tb = _round_up(max(int(batch_tile), row_align), row_align)
    B_pad = _round_up(B, tb)
    grid = (B_pad // tb,)

    # ---- Input: cast (and pad batch rows only if needed) — no feature padding ----
    x_c = x.astype(compute_dtype)
    if B_pad != B:
        x_c = jnp.pad(x_c, ((0, B_pad - B), (0, 0)))

    w1 = params["w1"].astype(compute_dtype)
    w2 = params["w2"].astype(compute_dtype)
    w3 = params["w3"].astype(compute_dtype)
    b1 = params["b1"].astype(jnp.float32)
    b2 = params["b2"].astype(jnp.float32)
    b3 = params["b3"].astype(jnp.float32)

    # Weights/biases: constant index_map -> loaded once, resident across the grid.
    full = lambda shape: pl.BlockSpec(shape, lambda i: (0, 0))

    # Cost estimate: real flops and real HBM traffic (helps XLA schedule the
    # surrounding cast/pad/slice ops around the Pallas call).
    dsize = jnp.dtype(compute_dtype).itemsize
    flops = 2 * B_pad * (IN * H + H * H + H * OUT)
    bytes_accessed = (B_pad * IN * dsize                       # x
                      + (IN * H + H * H + H * OUT) * dsize     # weights
                      + (H + H + OUT) * 4                      # biases (f32)
                      + B_pad * OUT * 4)                       # output (f32)
    cost = pl.CostEstimate(flops=flops, transcendentals=0,
                           bytes_accessed=bytes_accessed)

    out = pl.pallas_call(
        mlp_kernel,
        out_shape=jax.ShapeDtypeStruct((B_pad, OUT), jnp.float32),
        grid_spec=pltpu.PrefetchScalarGridSpec(
            num_scalar_prefetch=0,
            grid=grid,
            in_specs=[
                pl.BlockSpec((tb, IN), lambda i: (i, 0)),  # x tile (double-buffered)
                full((IN, H)),                              # w1
                full((1, H)),                               # b1
                full((H, H)),                               # w2
                full((1, H)),                               # b2
                full((H, OUT)),                             # w3
                full((1, OUT)),                             # b3
            ],
            out_specs=pl.BlockSpec((tb, OUT), lambda i: (i, 0)),
        ),
        compiler_params=pltpu.CompilerParams(
            dimension_semantics=("parallel",),  # batch axis -> megacore sharding on v7x
            vmem_limit_bytes=vmem_limit_bytes,  # only needed for tb >> 4096; default None
        ),
        cost_estimate=cost,
    )(x_c, w1, b1, w2, b2, w3, b3)

    # Slice away batch padding only (no column padding anymore).
    return out[:B] if B_pad != B else out


def init_params(key, input_shape, hidden, output_shape):
    """Deterministic PyTorch-style (kaiming-uniform-ish) init for the 3 Linear layers."""
    def linear_init(k, fan_in, fan_out):
        kw, kb = jax.random.split(k)
        bound = 1.0 / math.sqrt(fan_in)
        w = jax.random.uniform(kw, (fan_in, fan_out), jnp.float32, -bound, bound)
        b = jax.random.uniform(kb, (1, fan_out), jnp.float32, -bound, bound)
        return w, b

    k1, k2, k3 = jax.random.split(key, 3)
    w1, b1 = linear_init(k1, input_shape, hidden)
    w2, b2 = linear_init(k2, hidden, hidden)
    w3, b3 = linear_init(k3, hidden, output_shape)
    return {"w1": w1, "b1": b1, "w2": w2, "b2": b2, "w3": w3, "b3": b3}


if __name__ == "__main__":
    # Small shapes consistent with the module: observation vector -> action values.
    INPUT_SHAPE = 32
    OUTPUT_SHAPE = 4
    HIDDEN = 64
    BATCH = 64  # tb=16 -> 4 grid steps (>=2 per TensorCore on v7x)

    key = jax.random.PRNGKey(0)
    k_params, k_x = jax.random.split(key)

    params = init_params(k_params, INPUT_SHAPE, HIDDEN, OUTPUT_SHAPE)
    x = jax.random.normal(k_x, (BATCH, INPUT_SHAPE), dtype=jnp.float32)

    # Pure-JAX reference (f32).
    ref = jnp.maximum(x @ params["w1"] + params["b1"], 0.0)
    ref = jnp.maximum(ref @ params["w2"] + params["b2"], 0.0)
    ref = ref @ params["w3"] + params["b3"]

    # Default path: bf16 operands, f32 accumulation (looser tolerance).
    actions_bf16 = jax.block_until_ready(simplenet_forward(x, params))
    assert actions_bf16.shape == (BATCH, OUTPUT_SHAPE)
    assert jnp.allclose(actions_bf16, ref, atol=5e-2, rtol=5e-2)

    # f32 path (tight tolerance against the PyTorch-equivalent reference).
    actions_f32 = jax.block_until_ready(
        simplenet_forward(x, params, compute_dtype=jnp.float32))
    assert jnp.allclose(actions_f32, ref, atol=1e-5, rtol=1e-5)

    # Ragged-batch edge case (B not a multiple of the row alignment -> row padding path).
    x_small = x[:6]
    out_small = jax.block_until_ready(
        simplenet_forward(x_small, params, compute_dtype=jnp.float32))
    assert out_small.shape == (6, OUTPUT_SHAPE)
    assert jnp.allclose(out_small, ref[:6], atol=1e-5, rtol=1e-5)

    # TODO(synk): Adam optimizer, MSELoss and device placement from the PyTorch module
    # are training-side state, not part of the forward pass, and are not ported.

    print("KERNEL_OK")
</pallas_src>

<mosaic_0001>
module attributes {stable_mosaic.version = 11 : i64} {
  func.func @mlp_kernel(%arg0: i32, %arg1: memref<16x32xbf16, #tpu.memory_space<vmem>>, %arg2: memref<32x64xbf16, #tpu.memory_space<vmem>>, %arg3: memref<1x64xf32, #tpu.memory_space<vmem>>, %arg4: memref<64x64xbf16, #tpu.memory_space<vmem>>, %arg5: memref<1x64xf32, #tpu.memory_space<vmem>>, %arg6: memref<64x4xbf16, #tpu.memory_space<vmem>>, %arg7: memref<1x4xf32, #tpu.memory_space<vmem>>, %arg8: memref<16x4xf32, #tpu.memory_space<vmem>>) attributes {dimension_semantics = [#tpu.dimension_semantics<parallel>], iteration_bounds = array<i64: 4>, scalar_prefetch = 0 : i64, scratch_operands = 0 : i64, tpu.core_type = #tpu.core_type<tc>, window_params = [{transform_indices = @transform_0, window_bounds = array<i64: 16, 32>}, {pipeline_mode = #tpu.pipeline_mode<synchronous>, transform_indices = @transform_1, window_bounds = array<i64: 32, 64>}, {pipeline_mode = #tpu.pipeline_mode<synchronous>, transform_indices = @transform_2, window_bounds = array<i64: 1, 64>}, {pipeline_mode = #tpu.pipeline_mode<synchronous>, transform_indices = @transform_3, window_bounds = array<i64: 64, 64>}, {pipeline_mode = #tpu.pipeline_mode<synchronous>, transform_indices = @transform_4, window_bounds = array<i64: 1, 64>}, {pipeline_mode = #tpu.pipeline_mode<synchronous>, transform_indices = @transform_5, window_bounds = array<i64: 64, 4>}, {pipeline_mode = #tpu.pipeline_mode<synchronous>, transform_indices = @transform_6, window_bounds = array<i64: 1, 4>}, {transform_indices = @transform_7, window_bounds = array<i64: 16, 4>}]} {
    %c0 = arith.constant 0 : index
    %c0_0 = arith.constant 0 : index
    %0 = vector.load %arg1[%c0, %c0_0] : memref<16x32xbf16, #tpu.memory_space<vmem>>, vector<16x32xbf16>
    %c0_1 = arith.constant 0 : index
    %c0_2 = arith.constant 0 : index
    %1 = vector.load %arg2[%c0_1, %c0_2] : memref<32x64xbf16, #tpu.memory_space<vmem>>, vector<32x64xbf16>
    %cst = arith.constant dense<0.000000e+00> : vector<16x64xf32>
    %2 = tpu.matmul %0, %1, %cst {dimension_numbers = #tpu.dot_dimension_numbers<[1], [0], [0], [1], [0, 0, 1, 1], [], []>} : vector<16x32xbf16>, vector<32x64xbf16>, vector<16x64xf32> -> vector<16x64xf32>
    %c0_3 = arith.constant 0 : index
    %c0_4 = arith.constant 0 : index
    %3 = vector.load %arg3[%c0_3, %c0_4] : memref<1x64xf32, #tpu.memory_space<vmem>>, vector<1x64xf32>
    %4 = vector.broadcast %3 : vector<1x64xf32> to vector<16x64xf32>
    %5 = arith.addf %2, %4 : vector<16x64xf32>
    %cst_5 = arith.constant 0.000000e+00 : f32
    %6 = vector.broadcast %cst_5 : f32 to vector<16x64xf32>
    %7 = arith.maximumf %5, %6 : vector<16x64xf32>
    %8 = arith.truncf %7 : vector<16x64xf32> to vector<16x64xbf16>
    %c0_6 = arith.constant 0 : index
    %c0_7 = arith.constant 0 : index
    %9 = vector.load %arg4[%c0_6, %c0_7] : memref<64x64xbf16, #tpu.memory_space<vmem>>, vector<64x64xbf16>
    %cst_8 = arith.constant dense<0.000000e+00> : vector<16x64xf32>
    %10 = tpu.matmul %8, %9, %cst_8 {dimension_numbers = #tpu.dot_dimension_numbers<[1], [0], [0], [1], [0, 0, 1, 1], [], []>} : vector<16x64xbf16>, vector<64x64xbf16>, vector<16x64xf32> -> vector<16x64xf32>
    %c0_9 = arith.constant 0 : index
    %c0_10 = arith.constant 0 : index
    %11 = vector.load %arg5[%c0_9, %c0_10] : memref<1x64xf32, #tpu.memory_space<vmem>>, vector<1x64xf32>
    %12 = vector.broadcast %11 : vector<1x64xf32> to vector<16x64xf32>
    %13 = arith.addf %10, %12 : vector<16x64xf32>
    %cst_11 = arith.constant 0.000000e+00 : f32
    %14 = vector.broadcast %cst_11 : f32 to vector<16x64xf32>
    %15 = arith.maximumf %13, %14 : vector<16x64xf32>
    %16 = arith.truncf %15 : vector<16x64xf32> to vector<16x64xbf16>
    %c0_12 = arith.constant 0 : index
    %c0_13 = arith.constant 0 : index
    %17 = vector.load %arg6[%c0_12, %c0_13] : memref<64x4xbf16, #tpu.memory_space<vmem>>, vector<64x4xbf16>
    %cst_14 = arith.constant dense<0.000000e+00> : vector<16x4xf32>
    %18 = tpu.matmul %16, %17, %cst_14 {dimension_numbers = #tpu.dot_dimension_numbers<[1], [0], [0], [1], [0, 0, 1, 1], [], []>} : vector<16x64xbf16>, vector<64x4xbf16>, vector<16x4xf32> -> vector<16x4xf32>
    %c0_15 = arith.constant 0 : index
    %c0_16 = arith.constant 0 : index
    %19 = vector.load %arg7[%c0_15, %c0_16] : memref<1x4xf32, #tpu.memory_space<vmem>>, vector<1x4xf32>
    %20 = vector.broadcast %19 : vector<1x4xf32> to vector<16x4xf32>
    %21 = arith.addf %18, %20 : vector<16x4xf32>
    %c0_17 = arith.constant 0 : index
    %c0_18 = arith.constant 0 : index
    %22 = vector.load %arg8[%c0_17, %c0_18] : memref<16x4xf32, #tpu.memory_space<vmem>>, vector<16x4xf32>
    tpu.vector_store %arg8[%c0_17, %c0_18], %21 {strides = array<i32>} : memref<16x4xf32, #tpu.memory_space<vmem>>, vector<16x4xf32>,
    return
  }
  func.func @transform_0(%arg0: i32) -> (i32, i32) {
    %c0_i32 = arith.constant 0 : i32
    %c0_i32_0 = arith.constant 0 : i32
    return %arg0, %c0_i32 : i32, i32
  }
  func.func @transform_1(%arg0: i32) -> (i32, i32) {
    %c0_i32 = arith.constant 0 : i32
    %c0_i32_0 = arith.constant 0 : i32
    %c0_i32_1 = arith.constant 0 : i32
    return %c0_i32, %c0_i32_0 : i32, i32
  }
  func.func @transform_2(%arg0: i32) -> (i32, i32) {
    %c0_i32 = arith.constant 0 : i32
    %c0_i32_0 = arith.constant 0 : i32
    %c0_i32_1 = arith.constant 0 : i32
    return %c0_i32, %c0_i32_0 : i32, i32
  }
  func.func @transform_3(%arg0: i32) -> (i32, i32) {
    %c0_i32 = arith.constant 0 : i32
    %c0_i32_0 = arith.constant 0 : i32
    %c0_i32_1 = arith.constant 0 : i32
    return %c0_i32, %c0_i32_0 : i32, i32
  }
  func.func @transform_4(%arg0: i32) -> (i32, i32) {
    %c0_i32 = arith.constant 0 : i32
    %c0_i32_0 = arith.constant 0 : i32
    %c0_i32_1 = arith.constant 0 : i32
    return %c0_i32, %c0_i32_0 : i32, i32
  }
  func.func @transform_5(%arg0: i32) -> (i32, i32) {
    %c0_i32 = arith.constant 0 : i32
    %c0_i32_0 = arith.constant 0 : i32
    %c0_i32_1 = arith.constant 0 : i32
    return %c0_i32, %c0_i32_0 : i32, i32
  }
  func.func @transform_6(%arg0: i32) -> (i32, i32) {
    %c0_i32 = arith.constant 0 : i32
    %c0_i32_0 = arith.constant 0 : i32
    %c0_i32_1 = arith.constant 0 : i32
    return %c0_i32, %c0_i32_0 : i32, i32
  }
  func.func @transform_7(%arg0: i32) -> (i32, i32) {
    %c0_i32 = arith.constant 0 : i32
    %c0_i32_0 = arith.constant 0 : i32
    return %arg0, %c0_i32 : i32, i32
  }
}

</mosaic_0001>

<llo_original>
// kernel: tpu_custom_call.1
$region0: #{tpu_custom_call.1}
  #allocation0 [shape = 'u32[]', space=smem, size = 0x4, offset = 0x4, fixed_abs, tag = 'smem constant byte address 0x4 - core index']
  #allocation1 [shape = 'u32[72,128]{1,0:T(1,128)}', space=vmem, size = 0x9000, scoped, tag = 'internal scratch']
  %s0 = inlined_call_operand.vmem [shape: bf16[64,32], index: 0, kind: input, shape index: {}]
  %s1 = inlined_call_operand.vmem [shape: bf16[32,64], index: 1, kind: input, shape index: {}]
  %s2 = inlined_call_operand.vmem [shape: f32[1,64], index: 2, kind: input, shape index: {}]
  %s3 = inlined_call_operand.vmem [shape: bf16[64,64], index: 3, kind: input, shape index: {}]
  %s4 = inlined_call_operand.vmem [shape: f32[1,64], index: 4, kind: input, shape index: {}]
  %s5 = inlined_call_operand.vmem [shape: bf16[64,4], index: 5, kind: input, shape index: {}]
  %s6 = inlined_call_operand.vmem [shape: f32[1,4], index: 6, kind: input, shape index: {}]
  %s7 = inlined_call_operand.vmem [shape: f32[64,4], index: 7, kind: output, shape index: {}]
  %s8 = sld [smem:[#allocation0]]
  $region61: #{tpu_custom_call.1} parent=0
    _
  %s10 = ssub.s32 1, %s8
  %s11 = scalar_select 0, %s10, %s8
  loop: start=0, step=1, limit=6
  $region2: #{tpu_custom_call.1} parent=0 // loop_pre_header
    _
  $region3: #{tpu_custom_call.1} parent=0 // loop_header
    %s13 = sphi 0, %s17
    %p14 = scmp.ge.s32.totalorder %s13, 6
    %s23 = sphi 0, %s25
    %s26 = sphi 0, %s23
    %s27 = sphi 0, %s26
    %s43 = sphi 0, %s27
    %s47 = sphi 0, %s47
    %s49 = sphi 0, %s47
    %s50 = sphi 0, %s49
    %s64 = sphi 0, %s50
    %s68 = sphi 0, %s68
    %s70 = sphi 0, %s68
    %s71 = sphi 0, %s70
    %s85 = sphi 0, %s71
    %s89 = sphi 0, %s89
    %s91 = sphi 0, %s89
    %s92 = sphi 0, %s91
    %s106 = sphi 0, %s92
    %s110 = sphi 0, %s110
    %s112 = sphi 0, %s110
    %s113 = sphi 0, %s112
    %s127 = sphi 0, %s113
    %s131 = sphi 0, %s131
    %s133 = sphi 0, %s131
    %s134 = sphi 0, %s133
    %s148 = sphi 0, %s134
    %s152 = sphi 0, %s152
    %s154 = sphi 0, %s152
    %s155 = sphi 0, %s154
    %s169 = sphi 0, %s155
    %s175 = sphi 0, %s177
    %s178 = sphi 0, %s175
    %s179 = sphi 0, %s178
    %s195 = sphi 0, %s179
  $region4: #{tpu_custom_call.1} parent=0 // loop_header_branch
    %16 = sbr.rel (%p14) target = $region8
  $region5: #{tpu_custom_call.1} parent=0 // loop_body
    %s18 = ssub.s32 %s13, 1
    %s19 = ssub.s32 %s13, 2
    %s20 = sadd.s32 %s13, 1
    %s21 = ssub.s32 %s13, %s20
    %p22 = scmp.eq.s32.totalorder %s21, 0
    %s24 = sadd.s32 %s23, 1
    %s25 = scalar_select %p22, %s23, %s24
    %p28 = pneg %p22
    %p29 = scmp.eq.s32.totalorder %s13, 3
    %p30 = por %p28, %p29
    %p31 = scmp.ne.s32.totalorder %s23, %s26
    %p32 = scmp.eq.s32.totalorder %s13, 0
    %p33 = por %p31, %p32
    %p34 = scmp.ne.s32.totalorder %s23, %s26
    %p35 = scmp.eq.s32.totalorder %s18, 3
    %p36 = por %p34, %p35
    %p37 = scmp.ne.s32.totalorder %s26, %s27
    %p38 = scmp.eq.s32.totalorder %s18, 0
    %p39 = por %p37, %p38
    %p40 = scmp.ne.s32.totalorder %s26, %s27
    %p41 = scmp.eq.s32.totalorder %s19, 3
    %p42 = por %p40, %p41
    %p44 = scmp.ne.s32.totalorder %s27, %s43
    %p45 = scmp.eq.s32.totalorder %s19, 0
    %p46 = por %p44, %p45
    %s48 = sadd.s32 %s47, 1
    %p51 = scmp.eq.s32.totalorder %s13, 3
    %p52 = scmp.ne.s32.totalorder %s47, %s49
    %p53 = scmp.eq.s32.totalorder %s13, 0
    %p54 = por %p52, %p53
    %p55 = scmp.ne.s32.totalorder %s47, %s49
    %p56 = scmp.eq.s32.totalorder %s18, 3
    %p57 = por %p55, %p56
    %p58 = scmp.ne.s32.totalorder %s49, %s50
    %p59 = scmp.eq.s32.totalorder %s18, 0
    %p60 = por %p58, %p59
    %p61 = scmp.ne.s32.totalorder %s49, %s50
    %p62 = scmp.eq.s32.totalorder %s19, 3
    %p63 = por %p61, %p62
    %p65 = scmp.ne.s32.totalorder %s50, %s64
    %p66 = scmp.eq.s32.totalorder %s19, 0
    %p67 = por %p65, %p66
    %s69 = sadd.s32 %s68, 1
    %p72 = scmp.eq.s32.totalorder %s13, 3
    %p73 = scmp.ne.s32.totalorder %s68, %s70
    %p74 = scmp.eq.s32.totalorder %s13, 0
    %p75 = por %p73, %p74
    %p76 = scmp.ne.s32.totalorder %s68, %s70
    %p77 = scmp.eq.s32.totalorder %s18, 3
    %p78 = por %p76, %p77
    %p79 = scmp.ne.s32.totalorder %s70, %s71
    %p80 = scmp.eq.s32.totalorder %s18, 0
    %p81 = por %p79, %p80
    %p82 = scmp.ne.s32.totalorder %s70, %s71
    %p83 = scmp.eq.s32.totalorder %s19, 3
    %p84 = por %p82, %p83
    %p86 = scmp.ne.s32.totalorder %s71, %s85
    %p87 = scmp.eq.s32.totalorder %s19, 0
    %p88 = por %p86, %p87
    %s90 = sadd.s32 %s89, 1
    %p93 = scmp.eq.s32.totalorder %s13, 3
    %p94 = scmp.ne.s32.totalorder %s89, %s91
    %p95 = scmp.eq.s32.totalorder %s13, 0
    %p96 = por %p94, %p95
    %p97 = scmp.ne.s32.totalorder %s89, %s91
    %p98 = scmp.eq.s32.totalorder %s18, 3
    %p99 = por %p97, %p98
    %p100 = scmp.ne.s32.totalorder %s91, %s92
    %p101 = scmp.eq.s32.totalorder %s18, 0
    %p102 = por %p100, %p101
    %p103 = scmp.ne.s32.totalorder %s91, %s92
    %p104 = scmp.eq.s32.totalorder %s19, 3
    %p105 = por %p103, %p104
    %p107 = scmp.ne.s32.totalorder %s92, %s106
    %p108 = scmp.eq.s32.totalorder %s19, 0
    %p109 = por %p107, %p108
    %s111 = sadd.s32 %s110, 1
    %p114 = scmp.eq.s32.totalorder %s13, 3
    %p115 = scmp.ne.s32.totalorder %s110, %s112
    %p116 = scmp.eq.s32.totalorder %s13, 0
    %p117 = por %p115, %p116
    %p118 = scmp.ne.s32.totalorder %s110, %s112
    %p119 = scmp.eq.s32.totalorder %s18, 3
    %p120 = por %p118, %p119
    %p121 = scmp.ne.s32.totalorder %s112, %s113
    %p122 = scmp.eq.s32.totalorder %s18, 0
    %p123 = por %p121, %p122
    %p124 = scmp.ne.s32.totalorder %s112, %s113
    %p125 = scmp.eq.s32.totalorder %s19, 3
    %p126 = por %p124, %p125
    %p128 = scmp.ne.s32.totalorder %s113, %s127
    %p129 = scmp.eq.s32.totalorder %s19, 0
    %p130 = por %p128, %p129
    %s132 = sadd.s32 %s131, 1
    %p135 = scmp.eq.s32.totalorder %s13, 3
    %p136 = scmp.ne.s32.totalorder %s131, %s133
    %p137 = scmp.eq.s32.totalorder %s13, 0
    %p138 = por %p136, %p137
    %p139 = scmp.ne.s32.totalorder %s131, %s133
    %p140 = scmp.eq.s32.totalorder %s18, 3
    %p141 = por %p139, %p140
    %p142 = scmp.ne.s32.totalorder %s133, %s134
    %p143 = scmp.eq.s32.totalorder %s18, 0
    %p144 = por %p142, %p143
    %p145 = scmp.ne.s32.totalorder %s133, %s134
    %p146 = scmp.eq.s32.totalorder %s19, 3
    %p147 = por %p145, %p146
    %p149 = scmp.ne.s32.totalorder %s134, %s148
    %p150 = scmp.eq.s32.totalorder %s19, 0
    %p151 = por %p149, %p150
    %s153 = sadd.s32 %s152, 1
    %p156 = scmp.eq.s32.totalorder %s13, 3
    %p157 = scmp.ne.s32.totalorder %s152, %s154
    %p158 = scmp.eq.s32.totalorder %s13, 0
    %p159 = por %p157, %p158
    %p160 = scmp.ne.s32.totalorder %s152, %s154
    %p161 = scmp.eq.s32.totalorder %s18, 3
    %p162 = por %p160, %p161
    %p163 = scmp.ne.s32.totalorder %s154, %s155
    %p164 = scmp.eq.s32.totalorder %s18, 0
    %p165 = por %p163, %p164
    %p166 = scmp.ne.s32.totalorder %s154, %s155
    %p167 = scmp.eq.s32.totalorder %s19, 3
    %p168 = por %p166, %p167
    %p170 = scmp.ne.s32.totalorder %s155, %s169
    %p171 = scmp.eq.s32.totalorder %s19, 0
    %p172 = por %p170, %p171
    %s173 = ssub.s32 %s13, %s20
    %p174 = scmp.eq.s32.totalorder %s173, 0
    %s176 = sadd.s32 %s175, 1
    %s177 = scalar_select %p174, %s175, %s176
    %p180 = pneg %p174
    %p181 = scmp.eq.s32.totalorder %s13, 3
    %p182 = por %p180, %p181
    %p183 = scmp.ne.s32.totalorder %s175, %s178
    %p184 = scmp.eq.s32.totalorder %s13, 0
    %p185 = por %p183, %p184
    %p186 = scmp.ne.s32.totalorder %s175, %s178
    %p187 = scmp.eq.s32.totalorder %s18, 3
    %p188 = por %p186, %p187
    %p189 = scmp.ne.s32.totalorder %s178, %s179
    %p190 = scmp.eq.s32.totalorder %s18, 0
    %p191 = por %p189, %p190
    %p192 = scmp.ne.s32.totalorder %s178, %s179
    %p193 = scmp.eq.s32.totalorder %s19, 3
    %p194 = por %p192, %p193
    %p196 = scmp.ne.s32.totalorder %s179, %s195
    %p197 = scmp.eq.s32.totalorder %s19, 0
    %p198 = por %p196, %p197
    %p199 = scmp.le.s32.totalorder 1, %s13
    %p200 = scmp.lt.s32.totalorder %s13, 5
    %p201 = pnand %p199, %p200
    %p202 = pneg %p201
    // Predicated region
    $region9: #{tpu_custom_call.1} parent=5 // pred_check
      _
    $region10: #{tpu_custom_call.1} parent=5 // pred_check_branch
      %204 = sbr.rel (%p201) target = $region12
    $region11: #{tpu_custom_call.1} parent=5 // pred_region
      %s205 = ssub.s32 %s13, 1
      // Predicated region
      $region13: #{tpu_custom_call.1} parent=11 // pred_check
        %p206 = pneg %p60
      $region14: #{tpu_custom_call.1} parent=11 // pred_check_branch
        %208 = sbr.rel (%p206) target = $region16
      $region15: #{tpu_custom_call.1} parent=11 // pred_region
        _
      $region16: #{tpu_custom_call.1} parent=11 // pred_fallthru
        _
      // Predicated region
      $region17: #{tpu_custom_call.1} parent=11 // pred_check
        %p209 = pneg %p81
      $region18: #{tpu_custom_call.1} parent=11 // pred_check_branch
        %211 = sbr.rel (%p209) target = $region20
      $region19: #{tpu_custom_call.1} parent=11 // pred_region
        _
      $region20: #{tpu_custom_call.1} parent=11 // pred_fallthru
        _
      // Predicated region
      $region21: #{tpu_custom_call.1} parent=11 // pred_check
        %p212 = pneg %p102
      $region22: #{tpu_custom_call.1} parent=11 // pred_check_branch
        %214 = sbr.rel (%p212) target = $region24
      $region23: #{tpu_custom_call.1} parent=11 // pred_region
        _
      $region24: #{tpu_custom_call.1} parent=11 // pred_fallthru
        _
      // Predicated region
      $region25: #{tpu_custom_call.1} parent=11 // pred_check
        %p215 = pneg %p123
      $region26: #{tpu_custom_call.1} parent=11 // pred_check_branch
        %217 = sbr.rel (%p215) target = $region28
      $region27: #{tpu_custom_call.1} parent=11 // pred_region
        _
      $region28: #{tpu_custom_call.1} parent=11 // pred_fallthru
        _
      // Predicated region
      $region29: #{tpu_custom_call.1} parent=11 // pred_check
        %p218 = pneg %p144
      $region30: #{tpu_custom_call.1} parent=11 // pred_check_branch
        %220 = sbr.rel (%p218) target = $region32
      $region31: #{tpu_custom_call.1} parent=11 // pred_region
        _
      $region32: #{tpu_custom_call.1} parent=11 // pred_fallthru
        _
      // Predicated region
      $region33: #{tpu_custom_call.1} parent=11 // pred_check
        %p221 = pneg %p165
      $region34: #{tpu_custom_call.1} parent=11 // pred_check_branch
        %223 = sbr.rel (%p221) target = $region36
      $region35: #{tpu_custom_call.1} parent=11 // pred_region
        _
      $region36: #{tpu_custom_call.1} parent=11 // pred_fallthru
        _
    $region12: #{tpu_custom_call.1} parent=5 // pred_fallthru
      _
    %p224 = scmp.lt.s32.totalorder %s13, 4
    // Predicated region
    $region37: #{tpu_custom_call.1} parent=5 // pred_check
      %p225 = pneg %p224
    $region38: #{tpu_custom_call.1} parent=5 // pred_check_branch
      %227 = sbr.rel (%p225) target = $region40
    $region39: #{tpu_custom_call.1} parent=5 // pred_region
      // Predicated region
      $region41: #{tpu_custom_call.1} parent=39 // pred_check
        %p228 = pneg %p33
      $region42: #{tpu_custom_call.1} parent=39 // pred_check_branch
        %230 = sbr.rel (%p228) target = $region44
      $region43: #{tpu_custom_call.1} parent=39 // pred_region
        %s231 = smul.u32 2, %s13
        %p232 = scmp.lt.s32.totalorder %s231, 7
        %s233 = scalar_select %p232, %s231, 7
        %s234 = smul.addr %s233, 4
        %s235 = scalar_lea.vmem %s0, %s234
        %s236 = smul.u32 2, %s13
      $region44: #{tpu_custom_call.1} parent=39 // pred_fallthru
        _
    $region40: #{tpu_custom_call.1} parent=5 // pred_fallthru
      _
    %p237 = scmp.le.s32.totalorder 1, %s13
    %p238 = scmp.lt.s32.totalorder %s13, 5
    %p239 = pnand %p237, %p238
    %p240 = pneg %p239
    // Predicated region
    $region45: #{tpu_custom_call.1} parent=5 // pred_check
      _
    $region46: #{tpu_custom_call.1} parent=5 // pred_check_branch
      %242 = sbr.rel (%p239) target = $region48
    $region47: #{tpu_custom_call.1} parent=5 // pred_region
      %s243 = ssub.s32 %s13, 1
      %s244 = smul.u32 2, %s18
      %p245 = scmp.lt.s32.totalorder %s244, 7
      %s246 = scalar_select %p245, %s244, 7
      %s247 = smul.addr %s246, 4
      %s248 = scalar_lea.vmem %s0, %s247
      %p249 = pneg %p39
      %p250 = pneg %p36
      %p251 = pneg %p60
      %p252 = pneg %p57
      %p253 = pneg %p81
      %p254 = pneg %p78
      %p255 = pneg %p102
      %p256 = pneg %p99
      %p257 = pneg %p123
      %p258 = pneg %p120
      %p259 = pneg %p144
      %p260 = pneg %p141
      %p261 = pneg %p165
      %p262 = pneg %p162
      %p263 = pneg %p191
      %p264 = pneg %p188
      %s265 = smul.u32 2, %s18
      %p266 = scmp.lt.s32.totalorder %s265, 7
      %s267 = scalar_select %p266, %s265, 7
      %s268 = smul.addr %s267, 8
      %s269 = scalar_lea.vmem %s7, %s268
      %s270 = smul.u32 2, %s18
      %p271 = scmp.lt.s32.totalorder %s270, 7
      %s272 = scalar_select %p271, %s270, 7
      %s273 = smul.addr %s272, 4
      %s274 = scalar_lea.vmem %s0, %s273
      %s275 = smul.u32 2, %s18
      %s276 = smul.u32 2, %s18
      %p277 = scmp.lt.s32.totalorder %s276, 7
      %s278 = scalar_select %p277, %s276, 7
      %s279 = smul.addr %s278, 8
      %s280 = scalar_lea.vmem %s7, %s279
      %s281 = smul.u32 2, %s18
      %v283 = vld [vmem:[%s274] sm:$0xf]
      %v284 = vld [vmem:[%s274 + $0x4] sm:$0xf]
      %v285 = vld [vmem:[%s1] sm:$0xf]
      %v286 = vld [vmem:[%s1 + $0x4] sm:$0xf]
      %v287 = vld [vmem:[%s1 + $0x8] sm:$0xf]
      %v288 = vld [vmem:[%s1 + $0xc] sm:$0xf]
      %v289 = vld [vmem:[%s2] sm:$0x1]
      %v291 = vperm.slane %v289, 0
      %v295 = vunpack.c.l.b16 %v283
      %v296 = vunpack.c.l.b16 %v284
      %v297 = vpack.c.b16 %v296, %v295
      %v302 = vunpack.c.l.b16 %v285
      %v303 = vunpack.c.l.b16 %v286
      %v304 = vunpack.c.l.b16 %v287
      %v305 = vunpack.c.l.b16 %v288
      %v306 = vpack.c.b16 %v303, %v302
      %v307 = vpack.c.b16 %v305, %v304
      %vm310 = vcmask 261120
      %v312 = vsel %vm310, %v297, 0
      %314 = vmatpush.bf16.msra.mxu0 0
      %315 = vmatpush.bf16.msra.mxu0 0
      %316 = vmatpush.bf16.msra.mxu0 0
      %317 = vmatpush.bf16.msra.mxu0 0
      %318 = vmatpush.bf16.msra.mxu0 0
      %319 = vmatpush.bf16.msra.mxu0 0
      %320 = vmatpush.bf16.msra.mxu0 %v307
      %321 = vmatpush.bf16.msra.mxu0 %v306
      %322 = vmatmul.bf16.gmra.mxu0 %v312
      %v323 = vpop.f32.mrf.mxu0
      %v324 = vadd.f32 %v291, %v323
      %v325 = vpop.f32.mrf.mxu0
      %v326 = vadd.f32 %v291, %v325
      %327 = vdwg.mxu0
      %v328 = vmax.f32 %v324, 0.0
      %v329 = vmax.f32 %v326, 0.0
      %v330 = vpack.c.bf16 %v329, %v328
      %v331 = vld [vmem:[%s3] sm:$0xf]
      %v332 = vld [vmem:[%s3 + $0x4] sm:$0xf]
      %v333 = vld [vmem:[%s3 + $0x8] sm:$0xf]
      %v334 = vld [vmem:[%s3 + $0xc] sm:$0xf]
      %v335 = vld [vmem:[%s3 + $0x10] sm:$0xf]
      %v336 = vld [vmem:[%s3 + $0x14] sm:$0xf]
      %v337 = vld [vmem:[%s3 + $0x18] sm:$0xf]
      %v338 = vld [vmem:[%s3 + $0x1c] sm:$0xf]
      %v339 = vld [vmem:[%s4] sm:$0x1]
      %v341 = vperm.slane %v339, 0
      %v351 = vunpack.c.l.b16 %v331
      %v352 = vunpack.c.l.b16 %v332
      %v353 = vunpack.c.l.b16 %v333
      %v354 = vunpack.c.l.b16 %v334
      %v355 = vunpack.c.l.b16 %v335
      %v356 = vunpack.c.l.b16 %v336
      %v357 = vunpack.c.l.b16 %v337
      %v358 = vunpack.c.l.b16 %v338
      %v359 = vpack.c.b16 %v352, %v351
      %v360 = vpack.c.b16 %v354, %v353
      %v361 = vpack.c.b16 %v356, %v355
      %v362 = vpack.c.b16 %v358, %v357
      %vm367 = vcmask 523264
      %v369 = vsel %vm367, %v330, 0
      %371 = vmatpush.bf16.msra.mxu0 0
      %372 = vmatpush.bf16.msra.mxu0 0
      %373 = vmatpush.bf16.msra.mxu0 0
      %374 = vmatpush.bf16.msra.mxu0 0
      %375 = vmatpush.bf16.msra.mxu0 %v362
      %376 = vmatpush.bf16.msra.mxu0 %v361
      %377 = vmatpush.bf16.msra.mxu0 %v360
      %378 = vmatpush.bf16.msra.mxu0 %v359
      %379 = vmatmul.bf16.gmra.mxu0 %v369
      %v380 = vpop.f32.mrf.mxu0
      %v381 = vadd.f32 %v341, %v380
      %v382 = vpop.f32.mrf.mxu0
      %v383 = vadd.f32 %v341, %v382
      %384 = vdwg.mxu0
      %v385 = vmax.f32 %v381, 0.0
      %v386 = vmax.f32 %v383, 0.0
      %v387 = vpack.c.bf16 %v386, %v385
      %v388 = vld [vmem:[%s5] sm:$0xf]
      %v389 = vld [vmem:[%s5 + $0x4] sm:$0xf]
      %v390 = vld [vmem:[%s5 + $0x8] sm:$0xf]
      %v391 = vld [vmem:[%s5 + $0xc] sm:$0xf]
      %v392 = vld [vmem:[%s5 + $0x10] sm:$0xf]
      %v393 = vld [vmem:[%s5 + $0x14] sm:$0xf]
      %v394 = vld [vmem:[%s5 + $0x18] sm:$0xf]
      %v395 = vld [vmem:[%s5 + $0x1c] sm:$0xf]
      %v396 = vld [vmem:[%s6] sm:$0x1]
      %v398 = vperm.slane %v396, 0
      %v408 = vunpack.c.l.b16 %v388
      %v409 = vunpack.c.l.b16 %v389
      %v410 = vunpack.c.l.b16 %v390
      %v411 = vunpack.c.l.b16 %v391
      %v412 = vunpack.c.l.b16 %v392
      %v413 = vunpack.c.l.b16 %v393
      %v414 = vunpack.c.l.b16 %v394
      %v415 = vunpack.c.l.b16 %v395
      %v416 = vpack.c.b16 %v409, %v408
      %v417 = vpack.c.b16 %v411, %v410
      %v418 = vpack.c.b16 %v413, %v412
      %v419 = vpack.c.b16 %v415, %v414
      %v425 = vsel %vm367, %v387, 0
      %427 = vmatpush.bf16.msra.mxu0 0
      %428 = vmatpush.bf16.msra.mxu0 0
      %429 = vmatpush.bf16.msra.mxu0 0
      %430 = vmatpush.bf16.msra.mxu0 0
      %431 = vmatpush.bf16.msra.mxu0 %v419
      %432 = vmatpush.bf16.msra.mxu0 %v418
      %433 = vmatpush.bf16.msra.mxu0 %v417
      %434 = vmatpush.bf16.msra.mxu0 %v416
      %435 = vmatmul.bf16.gmra.mxu0 %v425
      %v436 = vpop.f32.mrf.mxu0
      %v437 = vadd.f32 %v398, %v436
      %v438 = vpop.f32.mrf.mxu0
      %v439 = vadd.f32 %v398, %v438
      %440 = vdwg.mxu0
      %vm441 = vcmask 31744
      %442 = vst.msk [vmem:[%s280] sm:$0xff] %vm441, %v437
      %443 = vst.msk [vmem:[%s280 + $0x8] sm:$0xff] %vm441, %v439
      %s444 = smul.u32 2, %s18
      %p445 = scmp.lt.s32.totalorder %s444, 7
      %s446 = scalar_select %p445, %s444, 7
      %s447 = smul.addr %s446, 8
      %s448 = scalar_lea.vmem %s7, %s447
      // Predicated region
      $region49: #{tpu_custom_call.1} parent=47 // pred_check
        %p449 = pneg %p188
      $region50: #{tpu_custom_call.1} parent=47 // pred_check_branch
        %451 = sbr.rel (%p449) target = $region52
      $region51: #{tpu_custom_call.1} parent=47 // pred_region
        %s452 = smul.u32 2, %s18
      $region52: #{tpu_custom_call.1} parent=47 // pred_fallthru
        _
    $region48: #{tpu_custom_call.1} parent=5 // pred_fallthru
      _
    %p453 = scmp.le.s32.totalorder 2, %s13
    // Predicated region
    $region53: #{tpu_custom_call.1} parent=5 // pred_check
      %p454 = pneg %p453
    $region54: #{tpu_custom_call.1} parent=5 // pred_check_branch
      %456 = sbr.rel (%p454) target = $region56
    $region55: #{tpu_custom_call.1} parent=5 // pred_region
      %s457 = ssub.s32 %s13, 2
      // Predicated region
      $region57: #{tpu_custom_call.1} parent=55 // pred_check
        %p458 = pneg %p194
      $region58: #{tpu_custom_call.1} parent=55 // pred_check_branch
        %460 = sbr.rel (%p458) target = $region60
      $region59: #{tpu_custom_call.1} parent=55 // pred_region
        %s461 = smul.u32 2, %s19
        %p462 = scmp.lt.s32.totalorder %s461, 7
        %s463 = scalar_select %p462, %s461, 7
        %s464 = smul.addr %s463, 8
        %s465 = scalar_lea.vmem %s7, %s464
      $region60: #{tpu_custom_call.1} parent=55 // pred_fallthru
        _
    $region56: #{tpu_custom_call.1} parent=5 // pred_fallthru
      _
  $region6: #{tpu_custom_call.1} parent=0 // loop_footer
    %s17 = sadd.s32 1, %s13
  $region7: #{tpu_custom_call.1} parent=0 // loop_footer_branch
    %12 = sbr.rel target = $region3
  $region8: #{tpu_custom_call.1} parent=0 // loop_exit
    _

</llo_original>
